<compile_context>
chip_gen: v7x
topology: tpu7x:2x2x1
jax: 0.10.0
libtpu: 0.0.40
codegen_flags: <defaults>
</compile_context>

<pallas_src>
import functools

import jax
import jax.numpy as jnp
from jax.experimental import pallas as pl
from jax.experimental.pallas import tpu as pltpu


def _pool_kernel(x_ref, o_ref, max_acc, sum_acc, *, hw, hw_tile, inv_hw):
    # x_ref: (row_tile, hw_tile); o_ref: (row_tile, 2) [max | avg]
    # max_acc/sum_acc: (row_tile, 128) f32 running reductions.
    k = pl.program_id(1)
    last = pl.num_programs(1) - 1
    row_tile = x_ref.shape[0]

    @pl.when(k == 0)
    def _():
        max_acc[...] = jnp.full(max_acc.shape, -jnp.inf, jnp.float32)
        sum_acc[...] = jnp.zeros(sum_acc.shape, jnp.float32)

    def update(masked):
        if hw_tile % 128 == 0:
            # Dense, lane-chunked element-wise accumulation: reduce the
            # hw_tile/128 chunks of this block in registers, then one RMW of
            # the 128-wide accumulators per step.
            n = hw_tile // 128
            if masked:
                lane = jax.lax.broadcasted_iota(jnp.int32, (row_tile, 128), 1)
                base = k * hw_tile
            m_run = None
            s_run = None
            for j in range(n):
                c = x_ref[:, j * 128:(j + 1) * 128].astype(jnp.float32)
                if masked:
                    valid = (base + j * 128 + lane) < hw
                    cm = jnp.where(valid, c, -jnp.inf)
                    cs = jnp.where(valid, c, 0.0)
                else:
                    cm = c
                    cs = c
                m_run = cm if m_run is None else jnp.maximum(m_run, cm)
                s_run = cs if s_run is None else s_run + cs
            max_acc[...] = jnp.maximum(max_acc[...], m_run)
            sum_acc[...] = sum_acc[...] + s_run
        else:
            # hw_tile == hw (single spatial block, whole row fits): direct
            # cross-lane reduce into lane 0.  Runs once per row tile only.
            x = x_ref[...].astype(jnp.float32)
            max_acc[:, 0:1] = jnp.maximum(
                max_acc[:, 0:1], jnp.max(x, axis=-1, keepdims=True))
            sum_acc[:, 0:1] = sum_acc[:, 0:1] + jnp.sum(x, axis=-1, keepdims=True)

    if hw % hw_tile != 0:
        # Only the final spatial block has a padded tail; keep all other
        # blocks on the unmasked fast path.
        @pl.when(k < last)
        def _():
            update(masked=False)

        @pl.when(k == last)
        def _():
            update(masked=True)
    else:
        update(masked=False)

    @pl.when(k == last)
    def _():
        # Cross-lane reduce + scale + cast + store: once per row tile.
        m = jnp.max(max_acc[...], axis=-1, keepdims=True)
        s = jnp.sum(sum_acc[...], axis=-1, keepdims=True) * inv_hw
        o_ref[:, 0:1] = m.astype(o_ref.dtype)
        o_ref[:, 1:2] = s.astype(o_ref.dtype)


def adaptive_concat_pool2d(x, *, max_hw_tile=8192, max_row_tile=1024,
                           block_budget_bytes=None):
    """x: (B, C, H, W) -> (B, 2*C, 1, 1) == torch.cat([maxpool1x1, avgpool1x1], 1)."""
    # TODO(synk): only output_size=1 (the module default, sz=None) is implemented;
    # general adaptive pooling to sz > 1 would need per-window index math.
    B, C, H, W = x.shape
    R = B * C
    hw = H * W
    x_flat = x.reshape(R, hw)

    itemsize = jnp.dtype(x.dtype).itemsize
    sub = max(8, 32 // itemsize)  # sublane pack: 8 (f32), 16 (bf16/f16)

    # Per-generation VMEM budget (v5e/v6e: 128 MiB; v7x: 64 MiB per core).
    try:
        vmem_cap = int(pltpu.get_tpu_info().vmem_capacity_bytes)
    except Exception:
        vmem_cap = 64 * 1024 * 1024  # conservative fallback (v7x per-core size)
    if block_budget_bytes is None:
        block_budget_bytes = max(2 * 1024 * 1024, vmem_cap // 5)

    # Spatial (lane) tile: full extent if small enough (fully contiguous DMA,
    # single spatial step), else a 128-multiple with the final tail masked.
    if hw <= max_hw_tile:
        hw_tile = hw
    else:
        hw_tile = max(128, (max_hw_tile // 128) * 128)

    # Row (sublane) tile: as many rows as the per-block VMEM budget allows,
    # rounded to the sublane pack; capped so the "parallel" row axis keeps
    # >= 2 (prefer 4) programs whenever R allows (v7x megacore sharding).
    rows_by_budget = max(sub, block_budget_bytes // max(1, hw_tile * itemsize))
    row_tile = min(max_row_tile, rows_by_budget)
    row_tile = max(sub, (row_tile // sub) * sub)
    desired_programs = 4 if R >= 4 * sub else (2 if R >= 2 * sub else 1)
    if desired_programs > 1:
        row_tile = min(row_tile, max(sub, (R // desired_programs // sub) * sub))
    if R <= row_tile:
        row_tile = R

    grid = (pl.cdiv(R, row_tile), pl.cdiv(hw, hw_tile))

    block_bytes = row_tile * hw_tile * itemsize
    scratch_bytes = 2 * row_tile * 128 * 4
    vmem_limit = int(min(vmem_cap * 3 // 4,
                         max(32 * 1024 * 1024, 3 * block_bytes + scratch_bytes)))

    kernel = functools.partial(
        _pool_kernel, hw=hw, hw_tile=hw_tile, inv_hw=1.0 / float(hw))

    out = pl.pallas_call(
        kernel,
        out_shape=jax.ShapeDtypeStruct((R, 2), x.dtype),
        grid=grid,
        in_specs=[pl.BlockSpec((row_tile, hw_tile), lambda i, k: (i, k))],
        out_specs=pl.BlockSpec((row_tile, 2), lambda i, k: (i, 0)),
        scratch_shapes=[pltpu.VMEM((row_tile, 128), jnp.float32),   # running max
                        pltpu.VMEM((row_tile, 128), jnp.float32)],  # running sum
        compiler_params=pltpu.CompilerParams(
            dimension_semantics=("parallel", "arbitrary"),
            vmem_limit_bytes=vmem_limit),
    )(x_flat)

    mx = out[:, 0].reshape(B, C, 1, 1)
    av = out[:, 1].reshape(B, C, 1, 1)
    return jnp.concatenate([mx, av], axis=1)


if __name__ == "__main__":
    def reference(x):
        ref_max = jnp.max(x, axis=(2, 3), keepdims=True)
        ref_avg = jnp.mean(x, axis=(2, 3), keepdims=True)
        return jnp.concatenate([ref_max, ref_avg], axis=1)

    # Primary test: shapes implied by the module.
    key = jax.random.PRNGKey(0)
    B, C, H, W = 2, 4, 16, 16
    x = jax.random.normal(key, (B, C, H, W), dtype=jnp.float32)
    y = jax.block_until_ready(adaptive_concat_pool2d(x))
    assert y.shape == (B, 2 * C, 1, 1), y.shape
    assert jnp.allclose(y, reference(x), atol=1e-5, rtol=1e-5), "mismatch vs reference"

    # Tiny tiles forced: exercises the tiled spatial axis, the masked LAST
    # block only, and a partial row tile.
    B2, C2, H2, W2 = 2, 5, 10, 20  # R = 10 rows, H*W = 200
    x2 = jax.random.normal(jax.random.PRNGKey(1), (B2, C2, H2, W2), jnp.float32)
    y2 = jax.block_until_ready(
        adaptive_concat_pool2d(x2, max_hw_tile=128, max_row_tile=8))
    assert y2.shape == (B2, 2 * C2, 1, 1), y2.shape
    assert jnp.allclose(y2, reference(x2), atol=1e-5, rtol=1e-5), \
        "mismatch vs reference (tiled/masked path)"

    # Default params on the same input: exercises the single-block fallback
    # path (H*W not a multiple of 128).
    y3 = jax.block_until_ready(adaptive_concat_pool2d(x2))
    assert jnp.allclose(y3, reference(x2), atol=1e-5, rtol=1e-5), \
        "mismatch vs reference (fallback path)"

    # bf16 input path (upcast-once-per-chunk, f32 accumulation).
    xb = jax.random.normal(jax.random.PRNGKey(2), (B, C, H, W),
                           jnp.float32).astype(jnp.bfloat16)
    yb = jax.block_until_ready(adaptive_concat_pool2d(xb))
    ref_b = reference(xb.astype(jnp.float32)).astype(jnp.bfloat16)
    assert yb.shape == (B, 2 * C, 1, 1), yb.shape
    assert jnp.allclose(yb.astype(jnp.float32), ref_b.astype(jnp.float32),
                        atol=1e-2, rtol=1e-2), "mismatch vs reference (bf16)"

    print("KERNEL_OK")
</pallas_src>

<mosaic_0001>
module attributes {stable_mosaic.version = 11 : i64} {
  func.func @_pool_kernel(%arg0: i32, %arg1: i32, %arg2: memref<8x256xf32, #tpu.memory_space<vmem>>, %arg3: memref<8x2xf32, #tpu.memory_space<vmem>>, %arg4: memref<8x128xf32, #tpu.memory_space<vmem>>, %arg5: memref<8x128xf32, #tpu.memory_space<vmem>>) attributes {dimension_semantics = [#tpu.dimension_semantics<parallel>, #tpu.dimension_semantics<arbitrary>], iteration_bounds = array<i64: 1, 1>, scalar_prefetch = 0 : i64, scratch_operands = 2 : i64, tpu.core_type = #tpu.core_type<tc>, window_params = [{transform_indices = @transform_0, window_bounds = array<i64: 8, 256>}, {transform_indices = @transform_1, window_bounds = array<i64: 8, 2>}]} {
    %c0_i32 = arith.constant 0 : i32
    %0 = arith.cmpi eq, %arg1, %c0_i32 : i32
    %1 = arith.extui %0 : i1 to i32
    %c0_i32_0 = arith.constant 0 : i32
    %2 = arith.cmpi ne, %1, %c0_i32_0 : i32
    scf.if %2 {
      %cst = arith.constant 0xFF800000 : f32
      %16 = vector.broadcast %cst : f32 to vector<8x128xf32>
      %c0_13 = arith.constant 0 : index
      %c0_14 = arith.constant 0 : index
      %17 = vector.load %arg4[%c0_13, %c0_14] : memref<8x128xf32, #tpu.memory_space<vmem>>, vector<8x128xf32>
      tpu.vector_store %arg4[%c0_13, %c0_14], %16 {strides = array<i32>} : memref<8x128xf32, #tpu.memory_space<vmem>>, vector<8x128xf32>,
      %cst_15 = arith.constant 0.000000e+00 : f32
      %18 = vector.broadcast %cst_15 : f32 to vector<8x128xf32>
      %c0_16 = arith.constant 0 : index
      %c0_17 = arith.constant 0 : index
      %19 = vector.load %arg5[%c0_16, %c0_17] : memref<8x128xf32, #tpu.memory_space<vmem>>, vector<8x128xf32>
      tpu.vector_store %arg5[%c0_16, %c0_17], %18 {strides = array<i32>} : memref<8x128xf32, #tpu.memory_space<vmem>>, vector<8x128xf32>,
    } else {
    }
    %c0 = arith.constant 0 : index
    %c0_1 = arith.constant 0 : index
    %3 = vector.load %arg2[%c0, %c0_1] : memref<8x256xf32, #tpu.memory_space<vmem>>, vector<8x128xf32>
    %c0_2 = arith.constant 0 : index
    %c128 = arith.constant 128 : index
    %4 = vector.load %arg2[%c0_2, %c128] : memref<8x256xf32, #tpu.memory_space<vmem>>, vector<8x128xf32>
    %5 = arith.maximumf %3, %4 : vector<8x128xf32>
    %6 = arith.addf %3, %4 : vector<8x128xf32>
    %c0_3 = arith.constant 0 : index
    %c0_4 = arith.constant 0 : index
    %7 = vector.load %arg4[%c0_3, %c0_4] : memref<8x128xf32, #tpu.memory_space<vmem>>, vector<8x128xf32>
    %8 = arith.maximumf %7, %5 : vector<8x128xf32>
    %c0_5 = arith.constant 0 : index
    %c0_6 = arith.constant 0 : index
    %9 = vector.load %arg4[%c0_5, %c0_6] : memref<8x128xf32, #tpu.memory_space<vmem>>, vector<8x128xf32>
    tpu.vector_store %arg4[%c0_5, %c0_6], %8 {strides = array<i32>} : memref<8x128xf32, #tpu.memory_space<vmem>>, vector<8x128xf32>,
    %c0_7 = arith.constant 0 : index
    %c0_8 = arith.constant 0 : index
    %10 = vector.load %arg5[%c0_7, %c0_8] : memref<8x128xf32, #tpu.memory_space<vmem>>, vector<8x128xf32>
    %11 = arith.addf %10, %6 : vector<8x128xf32>
    %c0_9 = arith.constant 0 : index
    %c0_10 = arith.constant 0 : index
    %12 = vector.load %arg5[%c0_9, %c0_10] : memref<8x128xf32, #tpu.memory_space<vmem>>, vector<8x128xf32>
    tpu.vector_store %arg5[%c0_9, %c0_10], %11 {strides = array<i32>} : memref<8x128xf32, #tpu.memory_space<vmem>>, vector<8x128xf32>,
    %c0_i32_11 = arith.constant 0 : i32
    %13 = arith.cmpi eq, %arg1, %c0_i32_11 : i32
    %14 = arith.extui %13 : i1 to i32
    %c0_i32_12 = arith.constant 0 : i32
    %15 = arith.cmpi ne, %14, %c0_i32_12 : i32
    scf.if %15 {
      %c0_13 = arith.constant 0 : index
      %c0_14 = arith.constant 0 : index
      %16 = vector.load %arg4[%c0_13, %c0_14] : memref<8x128xf32, #tpu.memory_space<vmem>>, vector<8x128xf32>
      %cst = arith.constant dense<0xFF800000> : vector<8xf32>
      %17 = vector.multi_reduction <maximumf>, %16, %cst [1] : vector<8x128xf32> to vector<8xf32>
      %18 = vector.shape_cast %17 : vector<8xf32> to vector<8x1xf32>
      %c0_15 = arith.constant 0 : index
      %c0_16 = arith.constant 0 : index
      %19 = vector.load %arg5[%c0_15, %c0_16] : memref<8x128xf32, #tpu.memory_space<vmem>>, vector<8x128xf32>
      %cst_17 = arith.constant dense<0.000000e+00> : vector<8xf32>
      %20 = vector.multi_reduction <add>, %19, %cst_17 [1] : vector<8x128xf32> to vector<8xf32>
      %21 = vector.shape_cast %20 : vector<8xf32> to vector<8x1xf32>
      %cst_18 = arith.constant 3.906250e-03 : f32
      %22 = vector.broadcast %cst_18 : f32 to vector<8x1xf32>
      %23 = arith.mulf %21, %22 : vector<8x1xf32>
      %c0_19 = arith.constant 0 : index
      %c0_20 = arith.constant 0 : index
      %24 = vector.load %arg3[%c0_19, %c0_20] : memref<8x2xf32, #tpu.memory_space<vmem>>, vector<8x1xf32>
      tpu.vector_store %arg3[%c0_19, %c0_20], %18 {strides = array<i32>} : memref<8x2xf32, #tpu.memory_space<vmem>>, vector<8x1xf32>,
      %c0_21 = arith.constant 0 : index
      %c1 = arith.constant 1 : index
      %25 = vector.load %arg3[%c0_21, %c1] : memref<8x2xf32, #tpu.memory_space<vmem>>, vector<8x1xf32>
      tpu.vector_store %arg3[%c0_21, %c1], %23 {strides = array<i32>} : memref<8x2xf32, #tpu.memory_space<vmem>>, vector<8x1xf32>,
    } else {
    }
    return
  }
  func.func @transform_0(%arg0: i32, %arg1: i32) -> (i32, i32) {
    %c0_i32 = arith.constant 0 : i32
    return %arg0, %arg1 : i32, i32
  }
  func.func @transform_1(%arg0: i32, %arg1: i32) -> (i32, i32) {
    %c0_i32 = arith.constant 0 : i32
    %c0_i32_0 = arith.constant 0 : i32
    return %arg0, %c0_i32 : i32, i32
  }
}

</mosaic_0001>

<llo_original>
// kernel: tpu_custom_call.1
$region0: #{tpu_custom_call.1}
  #allocation0 [shape = 'u32[]', space=smem, size = 0x4, offset = 0x4, fixed_abs, tag = 'smem constant byte address 0x4 - core index']
  #allocation1 [shape = 'u32[144,128]{1,0:T(1,128)}', space=vmem, size = 0x12000, scoped, tag = 'internal scratch']
  #allocation2 [shape = 'f32[8,128]{1,0:T(8,128)}', space=vmem, size = 0x1000, scoped, tag = 'scratch operand']
  #allocation3 [shape = 'f32[8,128]{1,0:T(8,128)}', space=vmem, size = 0x1000, scoped, tag = 'scratch operand']
  %s0 = inlined_call_operand.hbm [shape: f32[8,256], index: 0, kind: input, shape index: {}]
  %s1 = inlined_call_operand.vmem [shape: f32[8,2], index: 1, kind: output, shape index: {}]
  %s2 = sld [smem:[#allocation0]]
  $region26: #{tpu_custom_call.1} parent=0
    _
  %s4 = ssub.s32 1, %s2
  %s5 = scalar_select 0, %s4, %s2
  $region1: #{tpu_custom_call.1} parent=0
    #allocation4 [shape = 'u8[8192]{0}', space=vmem, size = 0x2000, scoped, tag = 'input window, operand 0, single buffered']
    #allocation5 [shape = 's32[1]{0}', space=sflag, size = 0x4, scoped, tag = 'scoped memory for tpu_custom_call.1']
    %6 = vsyncpa [#allocation5], 0
    // Predicated region
    $region2: #{tpu_custom_call.1} parent=1 // pred_check
      _
    $region3: #{tpu_custom_call.1} parent=1 // pred_check_branch
      %8 = sbr.rel (0) target = $region5
    $region4: #{tpu_custom_call.1} parent=1 // pred_region
      %s10 = ssub.s32 256, 256
      %11 = vsyncadd [#allocation5], %s10
      %s13 = sshll.u32 [#allocation4], 4
      %s14 = int_to_ptr.vmem [resolvable:$true] %s13
      %16 = dma.hbm_to_vmem [thread:$0]  %s0, 256, %s14, [#allocation5]
    $region5: #{tpu_custom_call.1} parent=1 // pred_fallthru
      _
    // Predicated region
    $region6: #{tpu_custom_call.1} parent=1 // pred_check
      _
    $region7: #{tpu_custom_call.1} parent=1 // pred_check_branch
      %18 = sbr.rel (0) target = $region9
    $region8: #{tpu_custom_call.1} parent=1 // pred_region
      %19 = dma.done [#allocation5], 256
    $region9: #{tpu_custom_call.1} parent=1 // pred_fallthru
      _
    %p20 = scmp.eq.s32.totalorder 0, 0
    // Predicated region
    $region10: #{tpu_custom_call.1} parent=1 // pred_check
      %p21 = pneg %p20
    $region11: #{tpu_custom_call.1} parent=1 // pred_check_branch
      %23 = sbr.rel (%p21) target = $region13
    $region12: #{tpu_custom_call.1} parent=1 // pred_region
      %24 = vst [vmem:[#allocation2] sm:$0xff] -inf
      %25 = vst [vmem:[#allocation3] sm:$0xff] 0.0
    $region13: #{tpu_custom_call.1} parent=1 // pred_fallthru
      _
    %v26 = vld [vmem:[#allocation4] sm:$0xff]
    %v27 = vld [vmem:[#allocation4 + $0x8] sm:$0xff]
    %v28 = vmax.f32 %v26, %v27
    %v29 = vadd.f32 %v26, %v27
    %v30 = vld [vmem:[#allocation2] sm:$0xff]
    %v31 = vmax.f32 %v30, %v28
    %32 = vst [vmem:[#allocation2] sm:$0xff] %v31
    %v33 = vld [vmem:[#allocation3] sm:$0xff]
    %v34 = vadd.f32 %v33, %v29
    %35 = vst [vmem:[#allocation3] sm:$0xff] %v34
    // Predicated region
    $region14: #{tpu_custom_call.1} parent=1 // pred_check
      %p36 = pneg %p20
    $region15: #{tpu_custom_call.1} parent=1 // pred_check_branch
      %38 = sbr.rel (%p36) target = $region17
    $region16: #{tpu_custom_call.1} parent=1 // pred_region
      %v39 = vld [vmem:[#allocation2] sm:$0xff]
      %40 = vmax.xlane.f32.xlu0 %v39
      %v41 = vpop.xlane.xlu0 %40
      %v42 = vld [vmem:[#allocation3] sm:$0xff]
      %43 = vadd.xlane.f32.xlu0 %v42
      %v44 = vpop.xlane.xlu0 %43
      %v45 = vmul.f32 %v44, 0.00390625
      %vm46 = vcmask 7168
      %47 = vst.msk [vmem:[%s1] sm:$0xff] %vm46, %v41
      %vm48 = vcmask 15368
      %49 = vst.msk [vmem:[%s1] sm:$0xff] %vm48, %v45
    $region17: #{tpu_custom_call.1} parent=1 // pred_fallthru
      _
    // Predicated region
    $region18: #{tpu_custom_call.1} parent=1 // pred_check
      _
    $region19: #{tpu_custom_call.1} parent=1 // pred_check_branch
      %51 = sbr.rel (0) target = $region21
    $region20: #{tpu_custom_call.1} parent=1 // pred_region
      _
    $region21: #{tpu_custom_call.1} parent=1 // pred_fallthru
      _
    // Predicated region
    $region22: #{tpu_custom_call.1} parent=1 // pred_check
      _
    $region23: #{tpu_custom_call.1} parent=1 // pred_check_branch
      %53 = sbr.rel (0) target = $region25
    $region24: #{tpu_custom_call.1} parent=1 // pred_region
      _
    $region25: #{tpu_custom_call.1} parent=1 // pred_fallthru
      _
    %54 = vsyncpa [#allocation5], 1

</llo_original>
